<compile_context>
chip_gen: v6e
topology: v6e:2x2x1
jax: 0.10.0
libtpu: 0.0.40
codegen_flags: <defaults>
</compile_context>

<pallas_src>
import math
import functools

import jax
import jax.numpy as jnp
from jax import lax
from jax.experimental import pallas as pl
from jax.experimental.pallas import tpu as pltpu

_INV_SQRT2 = 1.0 / math.sqrt(2.0)


def _round_up(x, m):
    return ((x + m - 1) // m) * m


# ---------------------------------------------------------------------------
# Trace-time hardware introspection (cached)
# ---------------------------------------------------------------------------
@functools.lru_cache(maxsize=1)
def _tpu_config():
    kind = ""
    try:
        kind = jax.devices()[0].device_kind.lower()
    except Exception:
        pass
    vmem_cap = None
    try:
        vmem_cap = int(pltpu.get_tpu_info().vmem_capacity_bytes)
    except Exception:
        vmem_cap = None
    if vmem_cap is None:
        # v7x has 64 MiB / TensorCore; v5e/v6e have 128 MiB.
        vmem_cap = 64 * 1024 * 1024 if "v7" in kind else 128 * 1024 * 1024
    # bf16 VPU/EUP exists on v6e / v7x; keep activations f32 elsewhere (v5e/v4).
    bf16_act = ("v6" in kind) or ("v7" in kind)
    return kind, vmem_cap, bf16_act


def _act_dtype(compute_dtype=jnp.bfloat16):
    _, _, bf16_act = _tpu_config()
    if bf16_act and jnp.dtype(compute_dtype) == jnp.dtype(jnp.bfloat16):
        return jnp.bfloat16
    return jnp.float32


# ---------------------------------------------------------------------------
# Kernels
# ---------------------------------------------------------------------------
def _gelu(h):
    # Exact erf-based GELU (torch.nn.GELU() default).
    return 0.5 * h * (1.0 + lax.erf(h * _INV_SQRT2))


def _mlp_kernel_resident(x_ref, w1_ref, b1_ref, w2_ref, b2_ref, o_ref, *,
                         act_dtype):
    """Whole MLP for one (tm, C) row tile.

    w1 / w2 / biases use constant index maps, so they are DMA'd from HBM
    exactly once and stay VMEM-resident across the row-tile grid.
    """
    x = x_ref[...].astype(w1_ref.dtype)          # in-kernel cast; x read once
    h = jnp.dot(x, w1_ref[...], preferred_element_type=jnp.float32)
    h = (h + b1_ref[...]).astype(act_dtype)      # f32 bias add -> act dtype
    h = _gelu(h)
    y = jnp.dot(h.astype(w2_ref.dtype), w2_ref[...],
                preferred_element_type=jnp.float32)
    # dropout(p=0.0) / eval mode is the identity.
    o_ref[...] = (y + b2_ref[...]).astype(o_ref.dtype)


def _mlp_kernel_blocked(x_ref, w1_ref, b1_ref, w2_ref, b2_ref, o_ref, acc_ref,
                        *, act_dtype):
    """One (tm, C) row tile x one tile_h slice of the 4C hidden dimension.

    grid = (grid_m, H // th); the hidden axis (last, "arbitrary") is a blocked
    reduction into the resident f32 VMEM accumulator acc_ref.
    """
    j = pl.program_id(1)

    @pl.when(j == 0)
    def _init():
        acc_ref[...] = jnp.zeros_like(acc_ref)

    x = x_ref[...].astype(w1_ref.dtype)
    h = jnp.dot(x, w1_ref[...], preferred_element_type=jnp.float32)
    h = (h + b1_ref[...]).astype(act_dtype)
    h = _gelu(h)
    acc_ref[...] += jnp.dot(h.astype(w2_ref.dtype), w2_ref[...],
                            preferred_element_type=jnp.float32)

    @pl.when(j == pl.num_programs(1) - 1)
    def _finalize():
        o_ref[...] = (acc_ref[...] + b2_ref[...]).astype(o_ref.dtype)


# ---------------------------------------------------------------------------
# Wrapper
# ---------------------------------------------------------------------------
@functools.partial(
    jax.jit,
    static_argnames=("tile_m", "tile_h", "compute_dtype", "force_path"))
def mlp_pallas(x, w1, b1, w2, b2, *, tile_m=None, tile_h=None,
               compute_dtype=jnp.bfloat16, force_path=None):
    """Fused MLP forward.

    x : (B, T, C)   w1 : (C, 4C)   b1 : (4C,)   w2 : (4C, C)   b2 : (C,)
    Matmul operands run in `compute_dtype` (bf16 on the MXU); accumulation and
    bias adds stay f32; GELU runs in bf16 on v6e/v7x, f32 on v5e.
    """
    B, T, C = x.shape
    H = w1.shape[1]                                  # 4 * n_embd
    M = B * T
    out_dtype = x.dtype

    x_isz = jnp.dtype(x.dtype).itemsize
    out_isz = jnp.dtype(out_dtype).itemsize
    w_isz = jnp.dtype(compute_dtype).itemsize

    kind, vmem_cap, _ = _tpu_config()
    act_dtype = _act_dtype(compute_dtype)
    act_isz = jnp.dtype(act_dtype).itemsize

    # VMEM limit per generation: ~100 MiB on 128-MiB parts (v5e/v6e), ~50 MiB
    # on v7x (64 MiB physical / TensorCore).
    vmem_limit = min(int(vmem_cap * 0.78), 100 * 1024 * 1024)
    budget = int(vmem_limit * 0.9)

    # ---- row tile ----------------------------------------------------------
    if tile_m is None:
        tm = 1024 if "v6" in kind else 512
    else:
        tm = tile_m
    tm = min(tm, _round_up(M, 8))
    tm = max(8, (tm // 8) * 8)
    grid_m = pl.cdiv(M, tm)

    # Keep the "parallel" row axis balanced across v7x's two TensorCores.
    if tile_m is None and "v7" in kind and grid_m > 1 and grid_m % 2 == 1:
        tm = max(8, _round_up(pl.cdiv(M, grid_m + 1), 8))
        grid_m = pl.cdiv(M, tm)

    # ---- operand staging ---------------------------------------------------
    # No wrapper-side cast/pad of x: original dtype in, cast in-kernel.
    x2d = x.reshape(M, C)
    # Weights are cast only if the caller did not already supply bf16 copies.
    w1c = w1 if w1.dtype == jnp.dtype(compute_dtype) else w1.astype(compute_dtype)
    w2c = w2 if w2.dtype == jnp.dtype(compute_dtype) else w2.astype(compute_dtype)
    b1_2d = b1.reshape(1, H).astype(jnp.float32)
    b2_2d = b2.reshape(1, C).astype(jnp.float32)

    # ---- path selection ----------------------------------------------------
    resident_bytes = (
        2 * 2 * C * H * w_isz                 # w1 + w2 (assume double-buffered)
        + 2 * tm * C * x_isz                  # x tile (double-buffered)
        + 2 * tm * C * out_isz                # out tile (double-buffered)
        + tm * H * (4 + act_isz)              # (tm, H) f32 matmul result + act
        + 2 * 2 * (H + C) * 4                 # biases
    )
    use_resident = resident_bytes <= budget
    if force_path == "resident":
        use_resident = True
    elif force_path == "blocked":
        use_resident = False

    if use_resident:
        # ---- Path A: weights fully VMEM-resident, single row-tile grid -----
        kernel = functools.partial(_mlp_kernel_resident, act_dtype=act_dtype)
        cost = pl.CostEstimate(
            flops=int(4 * M * C * H),
            transcendentals=int(M * H),
            bytes_accessed=int(M * C * x_isz + 2 * C * H * w_isz
                               + (H + C) * 4 + M * C * out_isz),
        )
        out2d = pl.pallas_call(
            kernel,
            out_shape=jax.ShapeDtypeStruct((M, C), out_dtype),
            grid_spec=pltpu.PrefetchScalarGridSpec(
                num_scalar_prefetch=0,
                grid=(grid_m,),
                in_specs=[
                    pl.BlockSpec((tm, C), lambda i: (i, 0)),   # x row tile
                    pl.BlockSpec((C, H), lambda i: (0, 0)),    # w1 (resident)
                    pl.BlockSpec((1, H), lambda i: (0, 0)),    # b1 (resident)
                    pl.BlockSpec((H, C), lambda i: (0, 0)),    # w2 (resident)
                    pl.BlockSpec((1, C), lambda i: (0, 0)),    # b2 (resident)
                ],
                out_specs=pl.BlockSpec((tm, C), lambda i: (i, 0)),
            ),
            compiler_params=pltpu.CompilerParams(
                dimension_semantics=("parallel",),
                vmem_limit_bytes=vmem_limit,
            ),
            cost_estimate=cost,
        )(x2d, w1c, b1_2d, w2c, b2_2d)
        return out2d.reshape(B, T, C)

    # ---- Path B: blocked hidden reduction ----------------------------------
    th_pref = tile_h
    if th_pref is None:
        th_pref = 256 if "v7" in kind else (1024 if "v6" in kind else 512)
    th = None
    for cand in (th_pref, 1024, 512, 256, 128):
        if cand is not None and cand <= H and H % cand == 0:
            th = cand
            break
    if th is None:
        if H <= 2048:
            th = H
        else:
            raise ValueError(
                f"hidden dim {H} has no usable tile: the blocked reduction "
                f"needs a multiple-of-128 divisor <= 1024 (got 4*n_embd={H}).")

    def _footprint(tm_, th_):
        return (2 * 2 * C * th_ * w_isz        # w1/w2 slices, double-buffered
                + 2 * tm_ * C * x_isz          # x tile
                + 2 * tm_ * C * out_isz        # out tile
                + tm_ * C * 4                  # f32 accumulator
                + tm_ * th_ * (4 + act_isz)    # (tm, th) intermediate
                + 2 * 2 * (th_ + C) * 4)       # biases

    # Shrink th first (preserves rows-per-weight-restream = tm), then tm.
    while _footprint(tm, th) > budget:
        if th > 512 and H % (th // 2) == 0:
            th //= 2
        elif tm > 512:
            tm = max(512, ((tm // 2) // 8) * 8)
        elif th > 128 and H % (th // 2) == 0:
            th //= 2
        elif tm > 64:
            tm = max(64, ((tm // 2) // 8) * 8)
        else:
            break
    grid_m = pl.cdiv(M, tm)
    grid_h = H // th

    kernel = functools.partial(_mlp_kernel_blocked, act_dtype=act_dtype)
    cost = pl.CostEstimate(
        flops=int(4 * M * C * H),
        transcendentals=int(M * H),
        # Weights are re-streamed once per row tile on this path.
        bytes_accessed=int(M * C * x_isz + 2 * C * H * w_isz * grid_m
                           + (H + C) * 4 + M * C * out_isz),
    )
    out2d = pl.pallas_call(
        kernel,
        out_shape=jax.ShapeDtypeStruct((M, C), out_dtype),
        grid_spec=pltpu.PrefetchScalarGridSpec(
            num_scalar_prefetch=0,
            grid=(grid_m, grid_h),
            in_specs=[
                pl.BlockSpec((tm, C), lambda i, j: (i, 0)),    # x row tile
                pl.BlockSpec((C, th), lambda i, j: (0, j)),    # w1 hidden slice
                pl.BlockSpec((1, th), lambda i, j: (0, j)),    # b1 hidden slice
                pl.BlockSpec((th, C), lambda i, j: (j, 0)),    # w2 hidden slice
                pl.BlockSpec((1, C), lambda i, j: (0, 0)),     # b2 (constant)
            ],
            out_specs=pl.BlockSpec((tm, C), lambda i, j: (i, 0)),
            scratch_shapes=[pltpu.VMEM((tm, C), jnp.float32)],
        ),
        compiler_params=pltpu.CompilerParams(
            # Row axis is embarrassingly parallel (shards across v7x's 2 TCs);
            # the hidden axis is the reduction -> "arbitrary", placed last.
            dimension_semantics=("parallel", "arbitrary"),
            vmem_limit_bytes=vmem_limit,
        ),
        cost_estimate=cost,
    )(x2d, w1c, b1_2d, w2c, b2_2d)
    return out2d.reshape(B, T, C)


# ---------------------------------------------------------------------------
# Pure-JAX reference (same matmul / activation dtypes as the kernel)
# ---------------------------------------------------------------------------
def mlp_reference(x, w1, b1, w2, b2, compute_dtype=jnp.bfloat16,
                  act_dtype=jnp.float32):
    xc = x.astype(compute_dtype)
    h = jnp.dot(xc, w1.astype(compute_dtype),
                preferred_element_type=jnp.float32) + b1.astype(jnp.float32)
    h = h.astype(act_dtype)
    h = 0.5 * h * (1.0 + lax.erf(h * _INV_SQRT2))
    y = jnp.dot(h.astype(compute_dtype), w2.astype(compute_dtype),
                preferred_element_type=jnp.float32) + b2.astype(jnp.float32)
    return y.astype(x.dtype)                         # dropout(p=0) is identity


if __name__ == "__main__":
    # Small shapes consistent with the module: batch=2, seq=8, n_embd=32.
    B, T, n_embd = 2, 8, 32
    hidden = 4 * n_embd

    key = jax.random.PRNGKey(0)
    kx, kw1, kb1, kw2, kb2 = jax.random.split(key, 5)

    x = jax.random.normal(kx, (B, T, n_embd), dtype=jnp.float32)

    # Deterministic torch-nn.Linear-style uniform init, stored (in, out).
    bound1 = 1.0 / math.sqrt(n_embd)
    w1 = jax.random.uniform(kw1, (n_embd, hidden), jnp.float32, -bound1, bound1)
    b1 = jax.random.uniform(kb1, (hidden,), jnp.float32, -bound1, bound1)
    bound2 = 1.0 / math.sqrt(hidden)
    w2 = jax.random.uniform(kw2, (hidden, n_embd), jnp.float32, -bound2, bound2)
    b2 = jax.random.uniform(kb2, (n_embd,), jnp.float32, -bound2, bound2)

    # Persistent bf16 weight copies (steady state: no per-call cast traffic).
    w1_bf = w1.astype(jnp.bfloat16)
    w2_bf = w2.astype(jnp.bfloat16)

    act_dt = _act_dtype(jnp.bfloat16)

    # Path A (auto-selected here): VMEM-resident weights, single row-tile grid.
    out = jax.block_until_ready(mlp_pallas(x, w1_bf, b1, w2_bf, b2))
    assert out.shape == (B, T, n_embd)
    ref = mlp_reference(x, w1, b1, w2, b2, act_dtype=act_dt)
    assert jnp.allclose(out, ref, atol=2e-3, rtol=2e-3), \
        "resident path: mismatch vs bf16-matmul reference"

    # Path B: blocked hidden reduction with multiple accumulation steps and a
    # ragged row count (M = 18 is not a multiple of tile_m = 8).
    B2, T2, C2 = 2, 9, 128
    H2 = 4 * C2
    k2 = jax.random.split(jax.random.PRNGKey(1), 5)
    x2 = jax.random.normal(k2[0], (B2, T2, C2), dtype=jnp.float32)
    bA = 1.0 / math.sqrt(C2)
    bB = 1.0 / math.sqrt(H2)
    w1b = jax.random.uniform(k2[1], (C2, H2), jnp.float32, -bA, bA)
    b1b = jax.random.uniform(k2[2], (H2,), jnp.float32, -bA, bA)
    w2b = jax.random.uniform(k2[3], (H2, C2), jnp.float32, -bB, bB)
    b2b = jax.random.uniform(k2[4], (C2,), jnp.float32, -bB, bB)

    out2 = jax.block_until_ready(
        mlp_pallas(x2, w1b, b1b, w2b, b2b, tile_m=8, tile_h=128,
                   force_path="blocked"))
    assert out2.shape == (B2, T2, C2)
    ref2 = mlp_reference(x2, w1b, b1b, w2b, b2b, act_dtype=act_dt)
    assert jnp.allclose(out2, ref2, atol=3e-3, rtol=3e-3), \
        "blocked path: mismatch vs bf16-matmul reference"

    # Loose sanity check against pure-f32 math (bf16 rounding tolerance).
    h32 = x @ w1 + b1
    h32 = 0.5 * h32 * (1.0 + lax.erf(h32 * _INV_SQRT2))
    ref_f32 = h32 @ w2 + b2
    assert jnp.allclose(out, ref_f32, atol=5e-2, rtol=5e-2), \
        "mismatch vs f32 reference"

    print("KERNEL_OK")
</pallas_src>

<mosaic_0001>
module attributes {stable_mosaic.version = 11 : i64} {
  func.func @_mlp_kernel_resident(%arg0: i32, %arg1: memref<16x32xf32, #tpu.memory_space<vmem>>, %arg2: memref<32x128xbf16, #tpu.memory_space<vmem>>, %arg3: memref<1x128xf32, #tpu.memory_space<vmem>>, %arg4: memref<128x32xbf16, #tpu.memory_space<vmem>>, %arg5: memref<1x32xf32, #tpu.memory_space<vmem>>, %arg6: memref<16x32xf32, #tpu.memory_space<vmem>>) attributes {dimension_semantics = [#tpu.dimension_semantics<parallel>], iteration_bounds = array<i64: 1>, scalar_prefetch = 0 : i64, scratch_operands = 0 : i64, tpu.core_type = #tpu.core_type<tc>, window_params = [{transform_indices = @transform_0, window_bounds = array<i64: 16, 32>}, {pipeline_mode = #tpu.pipeline_mode<synchronous>, transform_indices = @transform_1, window_bounds = array<i64: 32, 128>}, {pipeline_mode = #tpu.pipeline_mode<synchronous>, transform_indices = @transform_2, window_bounds = array<i64: 1, 128>}, {pipeline_mode = #tpu.pipeline_mode<synchronous>, transform_indices = @transform_3, window_bounds = array<i64: 128, 32>}, {pipeline_mode = #tpu.pipeline_mode<synchronous>, transform_indices = @transform_4, window_bounds = array<i64: 1, 32>}, {transform_indices = @transform_5, window_bounds = array<i64: 16, 32>}]} {
    %c0 = arith.constant 0 : index
    %c0_0 = arith.constant 0 : index
    %0 = vector.load %arg1[%c0, %c0_0] : memref<16x32xf32, #tpu.memory_space<vmem>>, vector<16x32xf32>
    %1 = arith.truncf %0 : vector<16x32xf32> to vector<16x32xbf16>
    %c0_1 = arith.constant 0 : index
    %c0_2 = arith.constant 0 : index
    %2 = vector.load %arg2[%c0_1, %c0_2] : memref<32x128xbf16, #tpu.memory_space<vmem>>, vector<32x128xbf16>
    %cst = arith.constant dense<0.000000e+00> : vector<16x128xf32>
    %3 = tpu.matmul %1, %2, %cst {dimension_numbers = #tpu.dot_dimension_numbers<[1], [0], [0], [1], [0, 0, 1, 1], [], []>} : vector<16x32xbf16>, vector<32x128xbf16>, vector<16x128xf32> -> vector<16x128xf32>
    %c0_3 = arith.constant 0 : index
    %c0_4 = arith.constant 0 : index
    %4 = vector.load %arg3[%c0_3, %c0_4] : memref<1x128xf32, #tpu.memory_space<vmem>>, vector<1x128xf32>
    %5 = vector.broadcast %4 : vector<1x128xf32> to vector<16x128xf32>
    %6 = arith.addf %3, %5 : vector<16x128xf32>
    %cst_5 = arith.constant 5.000000e-01 : f32
    %7 = vector.broadcast %cst_5 : f32 to vector<16x128xf32>
    %8 = arith.mulf %7, %6 : vector<16x128xf32>
    %cst_6 = arith.constant 0.707106769 : f32
    %9 = vector.broadcast %cst_6 : f32 to vector<16x128xf32>
    %10 = arith.mulf %6, %9 : vector<16x128xf32>
    %11 = math.erf %10 : vector<16x128xf32>
    %cst_7 = arith.constant 1.000000e+00 : f32
    %12 = vector.broadcast %cst_7 : f32 to vector<16x128xf32>
    %13 = arith.addf %12, %11 : vector<16x128xf32>
    %14 = arith.mulf %8, %13 : vector<16x128xf32>
    %15 = arith.truncf %14 : vector<16x128xf32> to vector<16x128xbf16>
    %c0_8 = arith.constant 0 : index
    %c0_9 = arith.constant 0 : index
    %16 = vector.load %arg4[%c0_8, %c0_9] : memref<128x32xbf16, #tpu.memory_space<vmem>>, vector<128x32xbf16>
    %cst_10 = arith.constant dense<0.000000e+00> : vector<16x32xf32>
    %17 = tpu.matmul %15, %16, %cst_10 {dimension_numbers = #tpu.dot_dimension_numbers<[1], [0], [0], [1], [0, 0, 1, 1], [], []>} : vector<16x128xbf16>, vector<128x32xbf16>, vector<16x32xf32> -> vector<16x32xf32>
    %c0_11 = arith.constant 0 : index
    %c0_12 = arith.constant 0 : index
    %18 = vector.load %arg5[%c0_11, %c0_12] : memref<1x32xf32, #tpu.memory_space<vmem>>, vector<1x32xf32>
    %19 = vector.broadcast %18 : vector<1x32xf32> to vector<16x32xf32>
    %20 = arith.addf %17, %19 : vector<16x32xf32>
    %c0_13 = arith.constant 0 : index
    %c0_14 = arith.constant 0 : index
    %21 = vector.load %arg6[%c0_13, %c0_14] : memref<16x32xf32, #tpu.memory_space<vmem>>, vector<16x32xf32>
    tpu.vector_store %arg6[%c0_13, %c0_14], %20 {strides = array<i32>} : memref<16x32xf32, #tpu.memory_space<vmem>>, vector<16x32xf32>,
    return
  }
  func.func @transform_0(%arg0: i32) -> (i32, i32) {
    %c0_i32 = arith.constant 0 : i32
    %c0_i32_0 = arith.constant 0 : i32
    return %arg0, %c0_i32 : i32, i32
  }
  func.func @transform_1(%arg0: i32) -> (i32, i32) {
    %c0_i32 = arith.constant 0 : i32
    %c0_i32_0 = arith.constant 0 : i32
    %c0_i32_1 = arith.constant 0 : i32
    return %c0_i32, %c0_i32_0 : i32, i32
  }
  func.func @transform_2(%arg0: i32) -> (i32, i32) {
    %c0_i32 = arith.constant 0 : i32
    %c0_i32_0 = arith.constant 0 : i32
    %c0_i32_1 = arith.constant 0 : i32
    return %c0_i32, %c0_i32_0 : i32, i32
  }
  func.func @transform_3(%arg0: i32) -> (i32, i32) {
    %c0_i32 = arith.constant 0 : i32
    %c0_i32_0 = arith.constant 0 : i32
    %c0_i32_1 = arith.constant 0 : i32
    return %c0_i32, %c0_i32_0 : i32, i32
  }
  func.func @transform_4(%arg0: i32) -> (i32, i32) {
    %c0_i32 = arith.constant 0 : i32
    %c0_i32_0 = arith.constant 0 : i32
    %c0_i32_1 = arith.constant 0 : i32
    return %c0_i32, %c0_i32_0 : i32, i32
  }
  func.func @transform_5(%arg0: i32) -> (i32, i32) {
    %c0_i32 = arith.constant 0 : i32
    %c0_i32_0 = arith.constant 0 : i32
    return %arg0, %c0_i32 : i32, i32
  }
}

</mosaic_0001>

<llo_original>
// kernel: mlp_pallas.1
$region0: #{mlp_pallas.1}
  #allocation0 [shape = 'u32[]', space=smem, size = 0x4, offset = 0x4, fixed_abs, tag = 'smem constant byte address 0x4 - core index']
  #allocation1 [shape = 'u32[144,128]{1,0:T(1,128)}', space=vmem, size = 0x12000, scoped, tag = 'internal scratch']
  %s0 = inlined_call_operand.vmem [shape: f32[16,32], index: 0, kind: input, shape index: {}]
  %s1 = inlined_call_operand.vmem [shape: bf16[32,128], index: 1, kind: input, shape index: {}]
  %s2 = inlined_call_operand.vmem [shape: f32[1,128], index: 2, kind: input, shape index: {}]
  %s3 = inlined_call_operand.vmem [shape: bf16[128,32], index: 3, kind: input, shape index: {}]
  %s4 = inlined_call_operand.vmem [shape: f32[1,32], index: 4, kind: input, shape index: {}]
  %s5 = inlined_call_operand.hbm [shape: f32[16,32], index: 5, kind: output, shape index: {}]
  %s6 = sld [smem:[#allocation0]]
  $region30: #{mlp_pallas.1} parent=0
    _
  %s8 = ssub.s32 1, %s6
  %s9 = scalar_select 0, %s8, %s6
  $region1: #{mlp_pallas.1} parent=0
    #allocation2 [shape = 'u8[8192]{0}', space=vmem, size = 0x2000, scoped, tag = 'output window, operand 0, single buffered']
    #allocation3 [shape = 's32[1]{0}', space=sflag, size = 0x4, scoped, tag = 'scoped memory for mlp_pallas.1']
    %10 = vsyncpa [#allocation3], 0
    // Predicated region
    $region2: #{mlp_pallas.1} parent=1 // pred_check
      _
    $region3: #{mlp_pallas.1} parent=1 // pred_check_branch
      %12 = sbr.rel (0) target = $region5
    $region4: #{mlp_pallas.1} parent=1 // pred_region
      _
    $region5: #{mlp_pallas.1} parent=1 // pred_fallthru
      _
    // Predicated region
    $region6: #{mlp_pallas.1} parent=1 // pred_check
      _
    $region7: #{mlp_pallas.1} parent=1 // pred_check_branch
      %14 = sbr.rel (0) target = $region9
    $region8: #{mlp_pallas.1} parent=1 // pred_region
      _
    $region9: #{mlp_pallas.1} parent=1 // pred_fallthru
      _
    // Predicated region
    $region10: #{mlp_pallas.1} parent=1 // pred_check
      _
    $region11: #{mlp_pallas.1} parent=1 // pred_check_branch
      %16 = sbr.rel (0) target = $region13
    $region12: #{mlp_pallas.1} parent=1 // pred_region
      _
    $region13: #{mlp_pallas.1} parent=1 // pred_fallthru
      _
    // Predicated region
    $region14: #{mlp_pallas.1} parent=1 // pred_check
      _
    $region15: #{mlp_pallas.1} parent=1 // pred_check_branch
      %18 = sbr.rel (0) target = $region17
    $region16: #{mlp_pallas.1} parent=1 // pred_region
      _
    $region17: #{mlp_pallas.1} parent=1 // pred_fallthru
      _
    // Predicated region
    $region18: #{mlp_pallas.1} parent=1 // pred_check
      _
    $region19: #{mlp_pallas.1} parent=1 // pred_check_branch
      %20 = sbr.rel (0) target = $region21
    $region20: #{mlp_pallas.1} parent=1 // pred_region
      _
    $region21: #{mlp_pallas.1} parent=1 // pred_fallthru
      _
    %v22 = vld [vmem:[%s0] sm:$0xff]
    %v23 = vld [vmem:[%s0 + $0x8] sm:$0xff]
    %v24 = vpack.c.bf16 %v23, %v22
    %v25 = vld [vmem:[%s1] sm:$0xf]
    %v26 = vld [vmem:[%s1 + $0x4] sm:$0xf]
    %v27 = vld [vmem:[%s1 + $0x8] sm:$0xf]
    %v28 = vld [vmem:[%s1 + $0xc] sm:$0xf]
    %v29 = vld [vmem:[%s2] sm:$0x1]
    %v31 = vlaneseq
    %v32 = vshrl.u32 %v31, 7
    %v33 = vsub.s32 0, %v32
    %v34 = vrot.slane %v29, %v33
    %v40 = vunpack.c.l.b16 %v25
    %v41 = vunpack.c.l.b16 %v26
    %v42 = vunpack.c.l.b16 %v27
    %v43 = vunpack.c.l.b16 %v28
    %v44 = vpack.c.b16 %v41, %v40
    %v45 = vpack.c.b16 %v43, %v42
    %vm48 = vcmask 261120
    %v50 = vsel %vm48, %v24, 0
    %52 = vmatprep.subr.bf16.mxu0 0
    %53 = vmatpush1.bf16.msra.mxu0 0
    %54 = vmatprep.subr.bf16.mxu0 0
    %55 = vmatpush1.bf16.msra.mxu0 0
    %56 = vmatprep.subr.bf16.mxu0 0
    %57 = vmatpush1.bf16.msra.mxu0 0
    %58 = vmatprep.subr.bf16.mxu0 0
    %59 = vmatpush1.bf16.msra.mxu0 0
    %60 = vmatprep.subr.bf16.mxu0 0
    %61 = vmatpush1.bf16.msra.mxu0 0
    %62 = vmatprep.subr.bf16.mxu0 0
    %63 = vmatpush1.bf16.msra.mxu0 0
    %64 = vmatprep.subr.bf16.mxu0 0
    %65 = vmatpush1.bf16.msra.mxu0 %v45
    %66 = vmatprep.subr.bf16.mxu0 0
    %67 = vmatpush1.bf16.msra.mxu0 %v44
    %68 = vmatprep.subr.bf16.mxu0 0
    %69 = vmatpush2.bf16.msra.mxu0 0
    %70 = vmatprep.subr.bf16.mxu0 0
    %71 = vmatpush2.bf16.msra.mxu0 0
    %72 = vmatprep.subr.bf16.mxu0 0
    %73 = vmatpush2.bf16.msra.mxu0 0
    %74 = vmatprep.subr.bf16.mxu0 0
    %75 = vmatpush2.bf16.msra.mxu0 0
    %76 = vmatprep.subr.bf16.mxu0 0
    %77 = vmatpush2.bf16.msra.mxu0 0
    %78 = vmatprep.subr.bf16.mxu0 0
    %79 = vmatpush2.bf16.msra.mxu0 0
    %80 = vmatprep.subr.bf16.mxu0 0
    %81 = vmatpush2.bf16.msra.mxu0 0
    %82 = vmatprep.subr.bf16.mxu0 0
    %83 = vmatpush2.bf16.msra.mxu0 0
    %84 = vmatprep.mubr.bf16.mxu0 0
    %85 = vmatmul.mubr.bf16.gmra.mxu0 %v50
    %v86 = vpop.f32.mrf.mxu0
    %v87 = vadd.f32 %v34, %v86
    %v88 = vpop.f32.mrf.mxu0
    %v89 = vpop.f32.mrf.mxu0
    %v90 = vadd.f32 %v34, %v89
    %v91 = vpop.f32.mrf.mxu0
    %92 = vdwg.mxu0
    %v93 = vmul.f32 %v87, 0.5
    %v94 = vmul.f32 %v90, 0.5
    %v95 = vmul.f32 %v87, 0.70710677
    %v96 = vmul.f32 %v90, 0.70710677
    %v97 = verf.f32.pop %v95
    %v98 = verf.f32.pop %v96
    %v99 = vadd.f32 %v97, 1.0
    %v100 = vadd.f32 %v98, 1.0
    %v101 = vmul.f32 %v93, %v99
    %v102 = vmul.f32 %v94, %v100
    %v103 = vpack.c.bf16 %v102, %v101
    %v104 = vld [vmem:[%s3] sm:$0xf]
    %v105 = vld [vmem:[%s3 + $0x4] sm:$0xf]
    %v106 = vld [vmem:[%s3 + $0x8] sm:$0xf]
    %v107 = vld [vmem:[%s3 + $0xc] sm:$0xf]
    %v108 = vld [vmem:[%s3 + $0x10] sm:$0xf]
    %v109 = vld [vmem:[%s3 + $0x14] sm:$0xf]
    %v110 = vld [vmem:[%s3 + $0x18] sm:$0xf]
    %v111 = vld [vmem:[%s3 + $0x1c] sm:$0xf]
    %v112 = vld [vmem:[%s3 + $0x20] sm:$0xf]
    %v113 = vld [vmem:[%s3 + $0x24] sm:$0xf]
    %v114 = vld [vmem:[%s3 + $0x28] sm:$0xf]
    %v115 = vld [vmem:[%s3 + $0x2c] sm:$0xf]
    %v116 = vld [vmem:[%s3 + $0x30] sm:$0xf]
    %v117 = vld [vmem:[%s3 + $0x34] sm:$0xf]
    %v118 = vld [vmem:[%s3 + $0x38] sm:$0xf]
    %v119 = vld [vmem:[%s3 + $0x3c] sm:$0xf]
    %v120 = vld [vmem:[%s4] sm:$0x1]
    %v122 = vlaneseq
    %v123 = vshrl.u32 %v122, 7
    %v124 = vsub.s32 0, %v123
    %v125 = vrot.slane %v120, %v124
    %v143 = vunpack.c.l.b16 %v104
    %v144 = vunpack.c.l.b16 %v105
    %v145 = vunpack.c.l.b16 %v106
    %v146 = vunpack.c.l.b16 %v107
    %v147 = vunpack.c.l.b16 %v108
    %v148 = vunpack.c.l.b16 %v109
    %v149 = vunpack.c.l.b16 %v110
    %v150 = vunpack.c.l.b16 %v111
    %v151 = vunpack.c.l.b16 %v112
    %v152 = vunpack.c.l.b16 %v113
    %v153 = vunpack.c.l.b16 %v114
    %v154 = vunpack.c.l.b16 %v115
    %v155 = vunpack.c.l.b16 %v116
    %v156 = vunpack.c.l.b16 %v117
    %v157 = vunpack.c.l.b16 %v118
    %v158 = vunpack.c.l.b16 %v119
    %v159 = vpack.c.b16 %v144, %v143
    %v160 = vpack.c.b16 %v146, %v145
    %v161 = vpack.c.b16 %v148, %v147
    %v162 = vpack.c.b16 %v150, %v149
    %v163 = vpack.c.b16 %v152, %v151
    %v164 = vpack.c.b16 %v154, %v153
    %v165 = vpack.c.b16 %v156, %v155
    %v166 = vpack.c.b16 %v158, %v157
    %175 = vmatprep.subr.bf16.mxu0 0
    %176 = vmatpush1.bf16.msra.mxu0 %v166
    %177 = vmatprep.subr.bf16.mxu0 0
    %178 = vmatpush1.bf16.msra.mxu0 %v165
    %179 = vmatprep.subr.bf16.mxu0 0
    %180 = vmatpush1.bf16.msra.mxu0 %v164
    %181 = vmatprep.subr.bf16.mxu0 0
    %182 = vmatpush1.bf16.msra.mxu0 %v163
    %183 = vmatprep.subr.bf16.mxu0 0
    %184 = vmatpush1.bf16.msra.mxu0 %v162
    %185 = vmatprep.subr.bf16.mxu0 0
    %186 = vmatpush1.bf16.msra.mxu0 %v161
    %187 = vmatprep.subr.bf16.mxu0 0
    %188 = vmatpush1.bf16.msra.mxu0 %v160
    %189 = vmatprep.subr.bf16.mxu0 0
    %190 = vmatpush1.bf16.msra.mxu0 %v159
    %191 = vmatprep.subr.bf16.mxu0 0
    %192 = vmatpush2.bf16.msra.mxu0 0
    %193 = vmatprep.subr.bf16.mxu0 0
    %194 = vmatpush2.bf16.msra.mxu0 0
    %195 = vmatprep.subr.bf16.mxu0 0
    %196 = vmatpush2.bf16.msra.mxu0 0
    %197 = vmatprep.subr.bf16.mxu0 0
    %198 = vmatpush2.bf16.msra.mxu0 0
    %199 = vmatprep.subr.bf16.mxu0 0
    %200 = vmatpush2.bf16.msra.mxu0 0
    %201 = vmatprep.subr.bf16.mxu0 0
    %202 = vmatpush2.bf16.msra.mxu0 0
    %203 = vmatprep.subr.bf16.mxu0 0
    %204 = vmatpush2.bf16.msra.mxu0 0
    %205 = vmatprep.subr.bf16.mxu0 0
    %206 = vmatpush2.bf16.msra.mxu0 0
    %207 = vmatprep.mubr.bf16.mxu0 0
    %208 = vmatmul.mubr.bf16.gmra.mxu0 %v103
    %v209 = vpop.f32.mrf.mxu0
    %v210 = vadd.f32 %v125, %v209
    %v211 = vpop.f32.mrf.mxu0
    %v212 = vpop.f32.mrf.mxu0
    %v213 = vadd.f32 %v125, %v212
    %v214 = vpop.f32.mrf.mxu0
    %215 = vdwg.mxu0
    %216 = vst.msk [vmem:[#allocation2] sm:$0xff] %vm48, %v210
    %217 = vst.msk [vmem:[#allocation2 + $0x8] sm:$0xff] %vm48, %v213
    // Predicated region
    $region22: #{mlp_pallas.1} parent=1 // pred_check
      _
    $region23: #{mlp_pallas.1} parent=1 // pred_check_branch
      %219 = sbr.rel (0) target = $region25
    $region24: #{mlp_pallas.1} parent=1 // pred_region
      %s221 = ssub.s32 256, 256
      %222 = vsyncadd [#allocation3], %s221
      %s223 = sshll.u32 [#allocation2], 4
      %s224 = int_to_ptr.vmem [resolvable:$true] %s223
      %229 = dma.vmem_to_hbm [thread:$0]  %s224, 256, %s5, [#allocation3], 128, 128, 8
    $region25: #{mlp_pallas.1} parent=1 // pred_fallthru
      _
    // Predicated region
    $region26: #{mlp_pallas.1} parent=1 // pred_check
      _
    $region27: #{mlp_pallas.1} parent=1 // pred_check_branch
      %231 = sbr.rel (0) target = $region29
    $region28: #{mlp_pallas.1} parent=1 // pred_region
      %232 = dma.done [#allocation3], 256
    $region29: #{mlp_pallas.1} parent=1 // pred_fallthru
      _
    %233 = vsyncpa [#allocation3], 1

</llo_original>
